<compile_context>
chip_gen: v7x
topology: tpu7x:2x2x1
jax: 0.10.0
libtpu: 0.0.40
codegen_flags: <defaults>
</compile_context>

<pallas_src>
import functools
import math

import jax
import jax.numpy as jnp
from jax.experimental import pallas as pl
from jax.experimental.pallas import tpu as pltpu

_LANES = 64          # widest layer of this network; all chunks padded to this
_MEGACORE_MIN = 256  # below this batch, don't bother forcing a 2-tile grid


def _round_up(n, m):
    return ((n + m - 1) // m) * m


def _mlp_kernel(x_ref, p_ref, o_ref, *, in_size, row_offsets, out_size):
    """Fused forward: relu(relu(relu(x@W1+b1)@W2+b2)@W3+b3)@W4+b4.

    p_ref: single packed parameter slab (R, 64). Weight chunks are zero-padded
    to 64 lanes (and, for layers 2-4, to 64 rows) so every intermediate stays a
    uniform (tb, 64) tensor; the 4 bias rows live at `row_offsets[-1]`.
    All slice bounds are static Python ints.
    """
    o1, o2, o3, o4, ob = row_offsets

    x = x_ref[...]

    w1 = p_ref[o1:o1 + in_size, :]   # (in_size, 64)
    w2 = p_ref[o2:o2 + _LANES, :]    # (64, 64)  (real 64x32, zero-padded cols)
    w3 = p_ref[o3:o3 + _LANES, :]    # (64, 64)  (real 32x8,  zero-padded)
    w4 = p_ref[o4:o4 + _LANES, :]    # (64, 64)  (real 8xout, zero-padded)
    b = p_ref[ob:ob + 4, :]          # (4, 64)   one zero-padded bias per row

    h = jnp.dot(x, w1, preferred_element_type=jnp.float32) + b[0:1, :]
    h = jnp.maximum(h, 0.0)

    h = jnp.dot(h, w2, preferred_element_type=jnp.float32) + b[1:2, :]
    h = jnp.maximum(h, 0.0)

    h = jnp.dot(h, w3, preferred_element_type=jnp.float32) + b[2:3, :]
    h = jnp.maximum(h, 0.0)

    out = jnp.dot(h, w4, preferred_element_type=jnp.float32) + b[3:4, :]
    # Only the final store needs the real output width.
    o_ref[...] = out[:, :out_size].astype(o_ref.dtype)


def pack_params(params):
    """Pack 4 weight matrices + 4 biases into ONE contiguous (R, 64) f32 slab.

    Weights W_l (in, out): zero-padded to (64, 64) for layers 2-4 and to
    (round_up(in_size, 8), 64) for layer 1, stacked along rows -> all row
    offsets are sublane-aligned and all in-kernel operands are 64 lanes wide.
    Biases: one zero-padded 64-lane row each, in an 8-row chunk at the end.
    Returns (p_slab, meta) where meta holds the static sizes/offsets.
    """
    ws = [params["w1"], params["w2"], params["w3"], params["w4"]]
    bs = [params["b1"], params["b2"], params["b3"], params["b4"]]
    in_size = ws[0].shape[0]
    out_size = ws[3].shape[1]

    row_targets = [_round_up(in_size, 8), _LANES, _LANES, _LANES]
    chunks, offsets, r = [], [], 0
    for w, rows in zip(ws, row_targets):
        offsets.append(r)
        chunks.append(jnp.pad(
            w.astype(jnp.float32),
            ((0, rows - w.shape[0]), (0, _LANES - w.shape[1]))))
        r += rows

    bias_offset = r
    b_chunk = jnp.zeros((8, _LANES), jnp.float32)
    for i, b in enumerate(bs):
        b_chunk = b_chunk.at[i, :b.shape[-1]].set(
            b.reshape(-1).astype(jnp.float32))
    chunks.append(b_chunk)

    p_slab = jnp.concatenate(chunks, axis=0)  # (R, 64)

    meta = dict(
        in_size=in_size,
        out_size=out_size,
        row_offsets=tuple(offsets) + (bias_offset,),
    )
    return p_slab, meta


def qnetwork_forward(x, p_slab, meta, *, block_batch=4096):
    """Run the fused MLP kernel over a batch-tiled grid.

    x:      (batch, input_size) float32
    p_slab, meta: output of pack_params().
    """
    batch, in_size = x.shape
    assert in_size == meta["in_size"]
    out_size = meta["out_size"]

    # Batch tile: multiple of 8, capped at block_batch. Partial / oversized
    # last tiles are handled by Pallas (padded reads, masked writes); rows are
    # independent so padded garbage never reaches valid output rows.
    tb = _round_up(min(block_batch, batch), 8)
    # Megacore (v7x): keep at least 2 batch tiles once the batch is large
    # enough to matter, so the "parallel" axis can shard across both TCs.
    if batch >= _MEGACORE_MIN and pl.cdiv(batch, tb) < 2:
        tb = _round_up(pl.cdiv(batch, 2), 8)
    grid = (pl.cdiv(batch, tb),)

    kernel = functools.partial(
        _mlp_kernel,
        in_size=meta["in_size"],
        row_offsets=meta["row_offsets"],
        out_size=out_size,
    )

    in_specs = [
        # x: streamed one batch tile per grid step.
        pl.BlockSpec((tb, in_size), lambda i: (i, 0)),
        # Parameter slab: same block every step -> fetched once, VMEM-resident.
        pl.BlockSpec(p_slab.shape, lambda i: (0, 0)),
    ]

    return pl.pallas_call(
        kernel,
        out_shape=jax.ShapeDtypeStruct((batch, out_size), jnp.float32),
        grid=grid,
        in_specs=in_specs,
        out_specs=pl.BlockSpec((tb, out_size), lambda i: (i, 0)),
        compiler_params=pltpu.CompilerParams(
            # Batch tiles are independent -> megacore-shardable on v7x.
            dimension_semantics=("parallel",)),
    )(x, p_slab)


def init_params(key, input_size, output_size):
    """Deterministic init mimicking nn.Linear's U(-1/sqrt(fan_in), 1/sqrt(fan_in))."""
    sizes = [(input_size, 64), (64, 32), (32, 8), (8, output_size)]
    params = {}
    for idx, (fan_in, fan_out) in enumerate(sizes, start=1):
        key, kw, kb = jax.random.split(key, 3)
        bound = 1.0 / math.sqrt(fan_in)
        params[f"w{idx}"] = jax.random.uniform(
            kw, (fan_in, fan_out), jnp.float32, -bound, bound)
        params[f"b{idx}"] = jax.random.uniform(
            kb, (1, fan_out), jnp.float32, -bound, bound)
    return params


if __name__ == "__main__":
    input_size = 16
    output_size = 4

    key = jax.random.PRNGKey(0)
    key, kx_small, kx_big = jax.random.split(key, 3)
    params = init_params(key, input_size, output_size)
    p_slab, meta = pack_params(params)

    # Pure-JAX reference of the same math.
    def ref(x, p):
        h = jnp.maximum(x @ p["w1"] + p["b1"], 0.0)
        h = jnp.maximum(h @ p["w2"] + p["b2"], 0.0)
        h = jnp.maximum(h @ p["w3"] + p["b3"], 0.0)
        return h @ p["w4"] + p["b4"]

    # Small batch (latency regime; single padded tile, batch < 8).
    x_small = jax.random.normal(kx_small, (2, input_size), dtype=jnp.float32)
    out_small = qnetwork_forward(x_small, p_slab, meta)
    jax.block_until_ready(out_small)
    assert out_small.shape == (2, output_size)
    assert jnp.allclose(out_small, ref(x_small, params), atol=1e-5, rtol=1e-5)

    # Multi-tile batch with a partial last tile (exercises grid + masking).
    x_big = jax.random.normal(kx_big, (300, input_size), dtype=jnp.float32)
    out_big = qnetwork_forward(x_big, p_slab, meta, block_batch=128)
    jax.block_until_ready(out_big)
    assert out_big.shape == (300, output_size)
    assert jnp.allclose(out_big, ref(x_big, params), atol=1e-5, rtol=1e-5)

    # Default (large) tile path: batch >= 256 forces a 2-tile grid (megacore).
    out_big2 = qnetwork_forward(x_big, p_slab, meta)
    jax.block_until_ready(out_big2)
    assert out_big2.shape == (300, output_size)
    assert jnp.allclose(out_big2, ref(x_big, params), atol=1e-5, rtol=1e-5)

    print("KERNEL_OK")
</pallas_src>

<mosaic_0001>
module attributes {stable_mosaic.version = 11 : i64} {
  func.func @_mlp_kernel(%arg0: i32, %arg1: memref<8x16xf32, #tpu.memory_space<vmem>>, %arg2: memref<216x64xf32, #tpu.memory_space<vmem>>, %arg3: memref<8x4xf32, #tpu.memory_space<vmem>>) attributes {dimension_semantics = [#tpu.dimension_semantics<parallel>], iteration_bounds = array<i64: 1>, scalar_prefetch = 0 : i64, scratch_operands = 0 : i64, tpu.core_type = #tpu.core_type<tc>, window_params = [{transform_indices = @transform_0, window_bounds = array<i64: 8, 16>}, {pipeline_mode = #tpu.pipeline_mode<synchronous>, transform_indices = @transform_1, window_bounds = array<i64: 216, 64>}, {transform_indices = @transform_2, window_bounds = array<i64: 8, 4>}]} {
    %c0 = arith.constant 0 : index
    %c0_0 = arith.constant 0 : index
    %0 = vector.load %arg1[%c0, %c0_0] : memref<8x16xf32, #tpu.memory_space<vmem>>, vector<8x16xf32>
    %c0_1 = arith.constant 0 : index
    %c0_2 = arith.constant 0 : index
    %1 = vector.load %arg2[%c0_1, %c0_2] : memref<216x64xf32, #tpu.memory_space<vmem>>, vector<16x64xf32>
    %c16 = arith.constant 16 : index
    %c0_3 = arith.constant 0 : index
    %2 = vector.load %arg2[%c16, %c0_3] : memref<216x64xf32, #tpu.memory_space<vmem>>, vector<64x64xf32>
    %c80 = arith.constant 80 : index
    %c0_4 = arith.constant 0 : index
    %3 = vector.load %arg2[%c80, %c0_4] : memref<216x64xf32, #tpu.memory_space<vmem>>, vector<64x64xf32>
    %c144 = arith.constant 144 : index
    %c0_5 = arith.constant 0 : index
    %4 = vector.load %arg2[%c144, %c0_5] : memref<216x64xf32, #tpu.memory_space<vmem>>, vector<64x64xf32>
    %c208 = arith.constant 208 : index
    %c0_6 = arith.constant 0 : index
    %5 = vector.load %arg2[%c208, %c0_6] : memref<216x64xf32, #tpu.memory_space<vmem>>, vector<4x64xf32>
    %cst = arith.constant dense<0.000000e+00> : vector<8x64xf32>
    %6 = tpu.matmul %0, %1, %cst {dimension_numbers = #tpu.dot_dimension_numbers<[1], [0], [0], [1], [0, 0, 1, 1], [], []>} : vector<8x16xf32>, vector<16x64xf32>, vector<8x64xf32> -> vector<8x64xf32>
    %7 = vector.extract_strided_slice %5 {offsets = [0, 0], sizes = [1, 64], strides = [1, 1]} : vector<4x64xf32> to vector<1x64xf32>
    %8 = vector.broadcast %7 : vector<1x64xf32> to vector<8x64xf32>
    %9 = arith.addf %6, %8 : vector<8x64xf32>
    %cst_7 = arith.constant 0.000000e+00 : f32
    %10 = vector.broadcast %cst_7 : f32 to vector<8x64xf32>
    %11 = arith.maximumf %9, %10 : vector<8x64xf32>
    %cst_8 = arith.constant dense<0.000000e+00> : vector<8x64xf32>
    %12 = tpu.matmul %11, %2, %cst_8 {dimension_numbers = #tpu.dot_dimension_numbers<[1], [0], [0], [1], [0, 0, 1, 1], [], []>} : vector<8x64xf32>, vector<64x64xf32>, vector<8x64xf32> -> vector<8x64xf32>
    %13 = vector.extract_strided_slice %5 {offsets = [1, 0], sizes = [1, 64], strides = [1, 1]} : vector<4x64xf32> to vector<1x64xf32>
    %14 = vector.broadcast %13 : vector<1x64xf32> to vector<8x64xf32>
    %15 = arith.addf %12, %14 : vector<8x64xf32>
    %cst_9 = arith.constant 0.000000e+00 : f32
    %16 = vector.broadcast %cst_9 : f32 to vector<8x64xf32>
    %17 = arith.maximumf %15, %16 : vector<8x64xf32>
    %cst_10 = arith.constant dense<0.000000e+00> : vector<8x64xf32>
    %18 = tpu.matmul %17, %3, %cst_10 {dimension_numbers = #tpu.dot_dimension_numbers<[1], [0], [0], [1], [0, 0, 1, 1], [], []>} : vector<8x64xf32>, vector<64x64xf32>, vector<8x64xf32> -> vector<8x64xf32>
    %19 = vector.extract_strided_slice %5 {offsets = [2, 0], sizes = [1, 64], strides = [1, 1]} : vector<4x64xf32> to vector<1x64xf32>
    %20 = vector.broadcast %19 : vector<1x64xf32> to vector<8x64xf32>
    %21 = arith.addf %18, %20 : vector<8x64xf32>
    %cst_11 = arith.constant 0.000000e+00 : f32
    %22 = vector.broadcast %cst_11 : f32 to vector<8x64xf32>
    %23 = arith.maximumf %21, %22 : vector<8x64xf32>
    %cst_12 = arith.constant dense<0.000000e+00> : vector<8x64xf32>
    %24 = tpu.matmul %23, %4, %cst_12 {dimension_numbers = #tpu.dot_dimension_numbers<[1], [0], [0], [1], [0, 0, 1, 1], [], []>} : vector<8x64xf32>, vector<64x64xf32>, vector<8x64xf32> -> vector<8x64xf32>
    %25 = vector.extract_strided_slice %5 {offsets = [3, 0], sizes = [1, 64], strides = [1, 1]} : vector<4x64xf32> to vector<1x64xf32>
    %26 = vector.broadcast %25 : vector<1x64xf32> to vector<8x64xf32>
    %27 = arith.addf %24, %26 : vector<8x64xf32>
    %28 = vector.extract_strided_slice %27 {offsets = [0, 0], sizes = [8, 4], strides = [1, 1]} : vector<8x64xf32> to vector<8x4xf32>
    %c0_13 = arith.constant 0 : index
    %c0_14 = arith.constant 0 : index
    %29 = vector.load %arg3[%c0_13, %c0_14] : memref<8x4xf32, #tpu.memory_space<vmem>>, vector<8x4xf32>
    tpu.vector_store %arg3[%c0_13, %c0_14], %28 {strides = array<i32>} : memref<8x4xf32, #tpu.memory_space<vmem>>, vector<8x4xf32>,
    return
  }
  func.func @transform_0(%arg0: i32) -> (i32, i32) {
    %c0_i32 = arith.constant 0 : i32
    %c0_i32_0 = arith.constant 0 : i32
    return %arg0, %c0_i32 : i32, i32
  }
  func.func @transform_1(%arg0: i32) -> (i32, i32) {
    %c0_i32 = arith.constant 0 : i32
    %c0_i32_0 = arith.constant 0 : i32
    %c0_i32_1 = arith.constant 0 : i32
    return %c0_i32, %c0_i32_0 : i32, i32
  }
  func.func @transform_2(%arg0: i32) -> (i32, i32) {
    %c0_i32 = arith.constant 0 : i32
    %c0_i32_0 = arith.constant 0 : i32
    return %arg0, %c0_i32 : i32, i32
  }
}

</mosaic_0001>

<llo_original>
// kernel: tpu_custom_call.1
$region0: #{tpu_custom_call.1}
  #allocation0 [shape = 'u32[]', space=smem, size = 0x4, offset = 0x4, fixed_abs, tag = 'smem constant byte address 0x4 - core index']
  #allocation1 [shape = 'u32[144,128]{1,0:T(1,128)}', space=vmem, size = 0x12000, scoped, tag = 'internal scratch']
  %s0 = inlined_call_operand.vmem [shape: f32[2,16], index: 0, kind: input, shape index: {}]
  %s1 = inlined_call_operand.vmem [shape: f32[216,64], index: 1, kind: input, shape index: {}]
  %s2 = inlined_call_operand.hbm [shape: f32[2,4], index: 2, kind: output, shape index: {}]
  %s3 = sld [smem:[#allocation0]]
  $region18: #{tpu_custom_call.1} parent=0
    _
  %s5 = ssub.s32 1, %s3
  %s6 = scalar_select 0, %s5, %s3
  $region1: #{tpu_custom_call.1} parent=0
    #allocation2 [shape = 'u8[4096]{0}', space=vmem, size = 0x1000, scoped, tag = 'output window, operand 0, single buffered']
    #allocation3 [shape = 's32[1]{0}', space=sflag, size = 0x4, scoped, tag = 'scoped memory for tpu_custom_call.1']
    %7 = vsyncpa [#allocation3], 0
    // Predicated region
    $region2: #{tpu_custom_call.1} parent=1 // pred_check
      _
    $region3: #{tpu_custom_call.1} parent=1 // pred_check_branch
      %9 = sbr.rel (0) target = $region5
    $region4: #{tpu_custom_call.1} parent=1 // pred_region
      _
    $region5: #{tpu_custom_call.1} parent=1 // pred_fallthru
      _
    // Predicated region
    $region6: #{tpu_custom_call.1} parent=1 // pred_check
      _
    $region7: #{tpu_custom_call.1} parent=1 // pred_check_branch
      %11 = sbr.rel (0) target = $region9
    $region8: #{tpu_custom_call.1} parent=1 // pred_region
      _
    $region9: #{tpu_custom_call.1} parent=1 // pred_fallthru
      _
    %v12 = vld [vmem:[%s0] sm:$0xff]
    %v13 = vld [vmem:[%s1] sm:$0xff]
    %v14 = vld [vmem:[%s1 + $0x8] sm:$0xff]
    %v15 = vld [vmem:[%s1 + $0x10] sm:$0xff]
    %v16 = vld [vmem:[%s1 + $0x18] sm:$0xff]
    %v17 = vld [vmem:[%s1 + $0x20] sm:$0xff]
    %v18 = vld [vmem:[%s1 + $0x28] sm:$0xff]
    %v19 = vld [vmem:[%s1 + $0x30] sm:$0xff]
    %v20 = vld [vmem:[%s1 + $0x38] sm:$0xff]
    %v21 = vld [vmem:[%s1 + $0x40] sm:$0xff]
    %v22 = vld [vmem:[%s1 + $0x48] sm:$0xff]
    %v23 = vld [vmem:[%s1 + $0x50] sm:$0xff]
    %v24 = vld [vmem:[%s1 + $0x58] sm:$0xff]
    %v25 = vld [vmem:[%s1 + $0x60] sm:$0xff]
    %v26 = vld [vmem:[%s1 + $0x68] sm:$0xff]
    %v27 = vld [vmem:[%s1 + $0x70] sm:$0xff]
    %v28 = vld [vmem:[%s1 + $0x78] sm:$0xff]
    %v29 = vld [vmem:[%s1 + $0x80] sm:$0xff]
    %v30 = vld [vmem:[%s1 + $0x88] sm:$0xff]
    %v31 = vld [vmem:[%s1 + $0x90] sm:$0xff]
    %v32 = vld [vmem:[%s1 + $0x98] sm:$0xff]
    %v33 = vld [vmem:[%s1 + $0xa0] sm:$0xff]
    %v34 = vld [vmem:[%s1 + $0xa8] sm:$0xff]
    %v35 = vld [vmem:[%s1 + $0xb0] sm:$0xff]
    %v36 = vld [vmem:[%s1 + $0xb8] sm:$0xff]
    %v37 = vld [vmem:[%s1 + $0xc0] sm:$0xff]
    %v38 = vld [vmem:[%s1 + $0xc8] sm:$0xff]
    %v39 = vld [vmem:[%s1 + $0xd0] sm:$0xf]
    %v40 = vlaneseq
    %v41 = vshrl.u32 %v40, 7
    %v42 = vsub.s32 0, %v41
    %v43 = vrot.slane %v39, %v42
    %vm44 = vcmask 130048
    %v46 = vsel %vm44, %v12, 0
    %48 = vmatprep.subr.mxu0 0.0
    %49 = vmatpush1.msra.mxu0 %v13
    %50 = vmatprep.subr.mxu0 0.0
    %51 = vmatpush1.msra.mxu0 %v14
    %52 = vmatprep.subr.mxu0 0.0
    %53 = vmatpush1.msra.mxu0 0.0
    %54 = vmatprep.subr.mxu0 0.0
    %55 = vmatpush1.msra.mxu0 0.0
    %56 = vmatprep.subr.mxu0 0.0
    %57 = vmatpush1.msra.mxu0 0.0
    %58 = vmatprep.subr.mxu0 0.0
    %59 = vmatpush1.msra.mxu0 0.0
    %60 = vmatprep.subr.mxu0 0.0
    %61 = vmatpush1.msra.mxu0 0.0
    %62 = vmatprep.subr.mxu0 0.0
    %63 = vmatpush1.msra.mxu0 0.0
    %64 = vmatprep.subr.mxu0 0.0
    %65 = vmatpush1.msra.mxu0 0.0
    %66 = vmatprep.subr.mxu0 0.0
    %67 = vmatpush1.msra.mxu0 0.0
    %68 = vmatprep.subr.mxu0 0.0
    %69 = vmatpush1.msra.mxu0 0.0
    %70 = vmatprep.subr.mxu0 0.0
    %71 = vmatpush1.msra.mxu0 0.0
    %72 = vmatprep.subr.mxu0 0.0
    %73 = vmatpush1.msra.mxu0 0.0
    %74 = vmatprep.subr.mxu0 0.0
    %75 = vmatpush1.msra.mxu0 0.0
    %76 = vmatprep.subr.mxu0 0.0
    %77 = vmatpush1.msra.mxu0 0.0
    %78 = vmatprep.subr.mxu0 0.0
    %79 = vmatpush1.msra.mxu0 0.0
    %80 = vmatprep.subr.mxu0 0.0
    %81 = vmatpush1.msra.mxu0 0.0
    %82 = vmatprep.subr.mxu0 0.0
    %83 = vmatpush1.msra.mxu0 0.0
    %84 = vmatprep.subr.mxu0 0.0
    %85 = vmatpush1.msra.mxu0 0.0
    %86 = vmatprep.subr.mxu0 0.0
    %87 = vmatpush1.msra.mxu0 0.0
    %88 = vmatprep.subr.mxu0 0.0
    %89 = vmatpush1.msra.mxu0 0.0
    %90 = vmatprep.subr.mxu0 0.0
    %91 = vmatpush1.msra.mxu0 0.0
    %92 = vmatprep.subr.mxu0 0.0
    %93 = vmatpush1.msra.mxu0 0.0
    %94 = vmatprep.subr.mxu0 0.0
    %95 = vmatpush1.msra.mxu0 0.0
    %96 = vmatprep.subr.mxu0 0.0
    %97 = vmatpush1.msra.mxu0 0.0
    %98 = vmatprep.subr.mxu0 0.0
    %99 = vmatpush1.msra.mxu0 0.0
    %100 = vmatprep.subr.mxu0 0.0
    %101 = vmatpush1.msra.mxu0 0.0
    %102 = vmatprep.subr.mxu0 0.0
    %103 = vmatpush1.msra.mxu0 0.0
    %104 = vmatprep.subr.mxu0 0.0
    %105 = vmatpush1.msra.mxu0 0.0
    %106 = vmatprep.subr.mxu0 0.0
    %107 = vmatpush1.msra.mxu0 0.0
    %108 = vmatprep.subr.mxu0 0.0
    %109 = vmatpush1.msra.mxu0 0.0
    %110 = vmatprep.subr.mxu0 0.0
    %111 = vmatpush1.msra.mxu0 0.0
    %112 = vmatprep.mubr.f32.mxu0 0.0
    %113 = vmatmul.mubr.f32.gmra.mrb[0].mxu0 %v46
    %v114 = vpop.f32.mrb[0].mxu0
    %v115 = vadd.f32 %v43, %v114
    %v116 = vpop.f32.mrb[0].mxu0
    %117 = vdwg.mxu0
    %v118 = vmax.f32 %v115, 0.0
    %v119 = vlaneseq
    %v120 = vshrl.u32 %v119, 7
    %v121 = vsub.s32 1, %v120
    %v122 = vrot.slane %v39, %v121
    %vm123 = vcmask 523264
    %v125 = vsel %vm123, %v118, 0
    %127 = vmatprep.subr.mxu0 0.0
    %128 = vmatpush1.msra.mxu0 %v15
    %129 = vmatprep.subr.mxu0 0.0
    %130 = vmatpush1.msra.mxu0 %v16
    %131 = vmatprep.subr.mxu0 0.0
    %132 = vmatpush1.msra.mxu0 %v17
    %133 = vmatprep.subr.mxu0 0.0
    %134 = vmatpush1.msra.mxu0 %v18
    %135 = vmatprep.subr.mxu0 0.0
    %136 = vmatpush1.msra.mxu0 %v19
    %137 = vmatprep.subr.mxu0 0.0
    %138 = vmatpush1.msra.mxu0 %v20
    %139 = vmatprep.subr.mxu0 0.0
    %140 = vmatpush1.msra.mxu0 %v21
    %141 = vmatprep.subr.mxu0 0.0
    %142 = vmatpush1.msra.mxu0 %v22
    %143 = vmatprep.subr.mxu0 0.0
    %144 = vmatpush1.msra.mxu0 0.0
    %145 = vmatprep.subr.mxu0 0.0
    %146 = vmatpush1.msra.mxu0 0.0
    %147 = vmatprep.subr.mxu0 0.0
    %148 = vmatpush1.msra.mxu0 0.0
    %149 = vmatprep.subr.mxu0 0.0
    %150 = vmatpush1.msra.mxu0 0.0
    %151 = vmatprep.subr.mxu0 0.0
    %152 = vmatpush1.msra.mxu0 0.0
    %153 = vmatprep.subr.mxu0 0.0
    %154 = vmatpush1.msra.mxu0 0.0
    %155 = vmatprep.subr.mxu0 0.0
    %156 = vmatpush1.msra.mxu0 0.0
    %157 = vmatprep.subr.mxu0 0.0
    %158 = vmatpush1.msra.mxu0 0.0
    %159 = vmatprep.subr.mxu0 0.0
    %160 = vmatpush1.msra.mxu0 0.0
    %161 = vmatprep.subr.mxu0 0.0
    %162 = vmatpush1.msra.mxu0 0.0
    %163 = vmatprep.subr.mxu0 0.0
    %164 = vmatpush1.msra.mxu0 0.0
    %165 = vmatprep.subr.mxu0 0.0
    %166 = vmatpush1.msra.mxu0 0.0
    %167 = vmatprep.subr.mxu0 0.0
    %168 = vmatpush1.msra.mxu0 0.0
    %169 = vmatprep.subr.mxu0 0.0
    %170 = vmatpush1.msra.mxu0 0.0
    %171 = vmatprep.subr.mxu0 0.0
    %172 = vmatpush1.msra.mxu0 0.0
    %173 = vmatprep.subr.mxu0 0.0
    %174 = vmatpush1.msra.mxu0 0.0
    %175 = vmatprep.subr.mxu0 0.0
    %176 = vmatpush1.msra.mxu0 0.0
    %177 = vmatprep.subr.mxu0 0.0
    %178 = vmatpush1.msra.mxu0 0.0
    %179 = vmatprep.subr.mxu0 0.0
    %180 = vmatpush1.msra.mxu0 0.0
    %181 = vmatprep.subr.mxu0 0.0
    %182 = vmatpush1.msra.mxu0 0.0
    %183 = vmatprep.subr.mxu0 0.0
    %184 = vmatpush1.msra.mxu0 0.0
    %185 = vmatprep.subr.mxu0 0.0
    %186 = vmatpush1.msra.mxu0 0.0
    %187 = vmatprep.subr.mxu0 0.0
    %188 = vmatpush1.msra.mxu0 0.0
    %189 = vmatprep.subr.mxu0 0.0
    %190 = vmatpush1.msra.mxu0 0.0
    %191 = vmatprep.mubr.f32.mxu0 0.0
    %192 = vmatmul.mubr.f32.gmra.mrb[0].mxu0 %v125
    %v193 = vpop.f32.mrb[0].mxu0
    %v194 = vadd.f32 %v122, %v193
    %v195 = vpop.f32.mrb[0].mxu0
    %196 = vdwg.mxu0
    %v197 = vmax.f32 %v194, 0.0
    %v198 = vlaneseq
    %v199 = vshrl.u32 %v198, 7
    %v200 = vsub.s32 2, %v199
    %v201 = vrot.slane %v39, %v200
    %v203 = vsel %vm123, %v197, 0
    %205 = vmatprep.subr.mxu0 0.0
    %206 = vmatpush1.msra.mxu0 %v23
    %207 = vmatprep.subr.mxu0 0.0
    %208 = vmatpush1.msra.mxu0 %v24
    %209 = vmatprep.subr.mxu0 0.0
    %210 = vmatpush1.msra.mxu0 %v25
    %211 = vmatprep.subr.mxu0 0.0
    %212 = vmatpush1.msra.mxu0 %v26
    %213 = vmatprep.subr.mxu0 0.0
    %214 = vmatpush1.msra.mxu0 %v27
    %215 = vmatprep.subr.mxu0 0.0
    %216 = vmatpush1.msra.mxu0 %v28
    %217 = vmatprep.subr.mxu0 0.0
    %218 = vmatpush1.msra.mxu0 %v29
    %219 = vmatprep.subr.mxu0 0.0
    %220 = vmatpush1.msra.mxu0 %v30
    %221 = vmatprep.subr.mxu0 0.0
    %222 = vmatpush1.msra.mxu0 0.0
    %223 = vmatprep.subr.mxu0 0.0
    %224 = vmatpush1.msra.mxu0 0.0
    %225 = vmatprep.subr.mxu0 0.0
    %226 = vmatpush1.msra.mxu0 0.0
    %227 = vmatprep.subr.mxu0 0.0
    %228 = vmatpush1.msra.mxu0 0.0
    %229 = vmatprep.subr.mxu0 0.0
    %230 = vmatpush1.msra.mxu0 0.0
    %231 = vmatprep.subr.mxu0 0.0
    %232 = vmatpush1.msra.mxu0 0.0
    %233 = vmatprep.subr.mxu0 0.0
    %234 = vmatpush1.msra.mxu0 0.0
    %235 = vmatprep.subr.mxu0 0.0
    %236 = vmatpush1.msra.mxu0 0.0
    %237 = vmatprep.subr.mxu0 0.0
    %238 = vmatpush1.msra.mxu0 0.0
    %239 = vmatprep.subr.mxu0 0.0
    %240 = vmatpush1.msra.mxu0 0.0
    %241 = vmatprep.subr.mxu0 0.0
    %242 = vmatpush1.msra.mxu0 0.0
    %243 = vmatprep.subr.mxu0 0.0
    %244 = vmatpush1.msra.mxu0 0.0
    %245 = vmatprep.subr.mxu0 0.0
    %246 = vmatpush1.msra.mxu0 0.0
    %247 = vmatprep.subr.mxu0 0.0
    %248 = vmatpush1.msra.mxu0 0.0
    %249 = vmatprep.subr.mxu0 0.0
    %250 = vmatpush1.msra.mxu0 0.0
    %251 = vmatprep.subr.mxu0 0.0
    %252 = vmatpush1.msra.mxu0 0.0
    %253 = vmatprep.subr.mxu0 0.0
    %254 = vmatpush1.msra.mxu0 0.0
    %255 = vmatprep.subr.mxu0 0.0
    %256 = vmatpush1.msra.mxu0 0.0
    %257 = vmatprep.subr.mxu0 0.0
    %258 = vmatpush1.msra.mxu0 0.0
    %259 = vmatprep.subr.mxu0 0.0
    %260 = vmatpush1.msra.mxu0 0.0
    %261 = vmatprep.subr.mxu0 0.0
    %262 = vmatpush1.msra.mxu0 0.0
    %263 = vmatprep.subr.mxu0 0.0
    %264 = vmatpush1.msra.mxu0 0.0
    %265 = vmatprep.subr.mxu0 0.0
    %266 = vmatpush1.msra.mxu0 0.0
    %267 = vmatprep.subr.mxu0 0.0
    %268 = vmatpush1.msra.mxu0 0.0
    %269 = vmatprep.mubr.f32.mxu0 0.0
    %270 = vmatmul.mubr.f32.gmra.mrb[0].mxu0 %v203
    %v271 = vpop.f32.mrb[0].mxu0
    %v272 = vadd.f32 %v201, %v271
    %v273 = vpop.f32.mrb[0].mxu0
    %274 = vdwg.mxu0
    %v275 = vmax.f32 %v272, 0.0
    %v276 = vlaneseq
    %v277 = vshrl.u32 %v276, 7
    %v278 = vsub.s32 3, %v277
    %v279 = vrot.slane %v39, %v278
    %v281 = vsel %vm123, %v275, 0
    %283 = vmatprep.subr.mxu0 0.0
    %284 = vmatpush1.msra.mxu0 %v31
    %285 = vmatprep.subr.mxu0 0.0
    %286 = vmatpush1.msra.mxu0 %v32
    %287 = vmatprep.subr.mxu0 0.0
    %288 = vmatpush1.msra.mxu0 %v33
    %289 = vmatprep.subr.mxu0 0.0
    %290 = vmatpush1.msra.mxu0 %v34
    %291 = vmatprep.subr.mxu0 0.0
    %292 = vmatpush1.msra.mxu0 %v35
    %293 = vmatprep.subr.mxu0 0.0
    %294 = vmatpush1.msra.mxu0 %v36
    %295 = vmatprep.subr.mxu0 0.0
    %296 = vmatpush1.msra.mxu0 %v37
    %297 = vmatprep.subr.mxu0 0.0
    %298 = vmatpush1.msra.mxu0 %v38
    %299 = vmatprep.subr.mxu0 0.0
    %300 = vmatpush1.msra.mxu0 0.0
    %301 = vmatprep.subr.mxu0 0.0
    %302 = vmatpush1.msra.mxu0 0.0
    %303 = vmatprep.subr.mxu0 0.0
    %304 = vmatpush1.msra.mxu0 0.0
    %305 = vmatprep.subr.mxu0 0.0
    %306 = vmatpush1.msra.mxu0 0.0
    %307 = vmatprep.subr.mxu0 0.0
    %308 = vmatpush1.msra.mxu0 0.0
    %309 = vmatprep.subr.mxu0 0.0
    %310 = vmatpush1.msra.mxu0 0.0
    %311 = vmatprep.subr.mxu0 0.0
    %312 = vmatpush1.msra.mxu0 0.0
    %313 = vmatprep.subr.mxu0 0.0
    %314 = vmatpush1.msra.mxu0 0.0
    %315 = vmatprep.subr.mxu0 0.0
    %316 = vmatpush1.msra.mxu0 0.0
    %317 = vmatprep.subr.mxu0 0.0
    %318 = vmatpush1.msra.mxu0 0.0
    %319 = vmatprep.subr.mxu0 0.0
    %320 = vmatpush1.msra.mxu0 0.0
    %321 = vmatprep.subr.mxu0 0.0
    %322 = vmatpush1.msra.mxu0 0.0
    %323 = vmatprep.subr.mxu0 0.0
    %324 = vmatpush1.msra.mxu0 0.0
    %325 = vmatprep.subr.mxu0 0.0
    %326 = vmatpush1.msra.mxu0 0.0
    %327 = vmatprep.subr.mxu0 0.0
    %328 = vmatpush1.msra.mxu0 0.0
    %329 = vmatprep.subr.mxu0 0.0
    %330 = vmatpush1.msra.mxu0 0.0
    %331 = vmatprep.subr.mxu0 0.0
    %332 = vmatpush1.msra.mxu0 0.0
    %333 = vmatprep.subr.mxu0 0.0
    %334 = vmatpush1.msra.mxu0 0.0
    %335 = vmatprep.subr.mxu0 0.0
    %336 = vmatpush1.msra.mxu0 0.0
    %337 = vmatprep.subr.mxu0 0.0
    %338 = vmatpush1.msra.mxu0 0.0
    %339 = vmatprep.subr.mxu0 0.0
    %340 = vmatpush1.msra.mxu0 0.0
    %341 = vmatprep.subr.mxu0 0.0
    %342 = vmatpush1.msra.mxu0 0.0
    %343 = vmatprep.subr.mxu0 0.0
    %344 = vmatpush1.msra.mxu0 0.0
    %345 = vmatprep.subr.mxu0 0.0
    %346 = vmatpush1.msra.mxu0 0.0
    %347 = vmatprep.mubr.f32.mxu0 0.0
    %348 = vmatmul.mubr.f32.gmra.mrb[0].mxu0 %v281
    %v349 = vpop.f32.mrb[0].mxu0
    %v350 = vadd.f32 %v279, %v349
    %v351 = vpop.f32.mrb[0].mxu0
    %352 = vdwg.mxu0
    %vm353 = vcmask 31744
    %354 = vst.msk [vmem:[#allocation2] sm:$0xff] %vm353, %v350
    // Predicated region
    $region10: #{tpu_custom_call.1} parent=1 // pred_check
      _
    $region11: #{tpu_custom_call.1} parent=1 // pred_check_branch
      %356 = sbr.rel (0) target = $region13
    $region12: #{tpu_custom_call.1} parent=1 // pred_region
      %s358 = ssub.s32 128, 32
      %359 = vsyncadd [#allocation3], %s358
      %s360 = sshll.u32 [#allocation2], 4
      %s361 = int_to_ptr.vmem [resolvable:$true] %s360
      %366 = dma.vmem_to_hbm [thread:$0]  %s361, 32, %s2, [#allocation3], 32, 32, 2
    $region13: #{tpu_custom_call.1} parent=1 // pred_fallthru
      _
    // Predicated region
    $region14: #{tpu_custom_call.1} parent=1 // pred_check
      _
    $region15: #{tpu_custom_call.1} parent=1 // pred_check_branch
      %368 = sbr.rel (0) target = $region17
    $region16: #{tpu_custom_call.1} parent=1 // pred_region
      %369 = dma.done [#allocation3], 128
    $region17: #{tpu_custom_call.1} parent=1 // pred_fallthru
      _
    %370 = vsyncpa [#allocation3], 1

</llo_original>
